<compile_context>
chip_gen: v5e
topology: v5e:2x2
jax: 0.10.0
libtpu: 0.0.40
codegen_flags: <defaults>
</compile_context>

<pallas_src>
import functools
import itertools

import jax
import jax.numpy as jnp
import numpy as np
from jax.experimental import pallas as pl
from jax.experimental.pallas import tpu as pltpu

LANE = 128      # TPU lane width: channel-like dims are padded to this.
SUBLANE = 8


def _round_up(x, m):
    return (x + m - 1) // m * m


# ----------------------------------------------------------------------------
# pltpu.roll direction probe (one tiny kernel, run once outside jit)
# ----------------------------------------------------------------------------
_ROLL_LIKE_JNP = None


def _roll_like_jnp():
    """True if pltpu.roll(x, s, 0)[i] == x[(i - s) % n] (jnp.roll convention)."""
    global _ROLL_LIKE_JNP
    if _ROLL_LIKE_JNP is None:
        def probe(x_ref, o_ref):
            o_ref[...] = pltpu.roll(x_ref[...], shift=1, axis=0)

        x = jnp.broadcast_to(
            jnp.arange(SUBLANE, dtype=jnp.float32)[:, None], (SUBLANE, LANE))
        out = pl.pallas_call(
            probe,
            out_shape=jax.ShapeDtypeStruct((SUBLANE, LANE), jnp.float32))(x)
        _ROLL_LIKE_JNP = bool(np.asarray(out)[0, 0] == SUBLANE - 1)
    return _ROLL_LIKE_JNP


# ----------------------------------------------------------------------------
# Fused branch-pair kernel: stem -> conv1 -> conv2+skip -> GAP -> FC, all in
# VMEM, grid axis = branch index (sm1/sm2 or ts1/ts2).
# ----------------------------------------------------------------------------
def _branch_pair_kernel(x_ref, pool_ref, ws_ref, bs_ref, w1_ref, b1_ref,
                        w2_ref, b2_ref, wf_ref, bf_ref, o_ref,
                        *, spatial, deltas, roll_like_jnp):
    M, C = x_ref.shape     # flattened (batch * spatial) rows, padded lanes

    # Per-row spatial coordinates (rows are (batch, *spatial) flattened; all
    # spatial dims are powers of two, so shifts/ands recover coordinates).
    row = jax.lax.broadcasted_iota(jnp.int32, (M, C), 0)
    not_lo, not_hi, strides = [], [], []
    shift, stride = 0, 1
    for size in reversed(spatial):
        coord = jnp.bitwise_and(jnp.right_shift(row, shift), size - 1)
        not_lo.append(coord > 0)            # a "-1" tap is valid here
        not_hi.append(coord < size - 1)     # a "+1" tap is valid here
        strides.append(stride)
        shift += int(size).bit_length() - 1
        stride *= size
    not_lo, not_hi, strides = not_lo[::-1], not_hi[::-1], strides[::-1]

    def row_shift(act, k):
        # out[i] = act[(i + k) % M]
        k = k % M
        if k == 0:
            return act
        s = (-k) % M if roll_like_jnp else k
        return pltpu.roll(act, shift=s, axis=0)

    def shifted_tap(act, delta):
        """act shifted by `delta` taps, zero-filled at the spatial borders."""
        off = sum(d * s for d, s in zip(delta, strides))
        v = row_shift(act, off)
        mask = None
        for axis, d in enumerate(delta):
            if d == 0:
                continue
            m = not_lo[axis] if d < 0 else not_hi[axis]
            mask = m if mask is None else jnp.logical_and(mask, m)
        return v if mask is None else jnp.where(mask, v, 0.0)

    def conv_relu(act, w_ref_, b_ref_, residual=None):
        acc = jnp.zeros((M, w_ref_.shape[-1]), jnp.float32)
        for t, delta in enumerate(deltas):
            acc = acc + jnp.dot(shifted_tap(act, delta), w_ref_[0, t],
                                preferred_element_type=jnp.float32)
        acc = acc + b_ref_[0][0:1, :]
        if residual is not None:
            acc = acc + residual
        return jnp.maximum(acc, 0.0)

    h = conv_relu(x_ref[...], ws_ref, bs_ref)        # stem conv + ReLU
    u = conv_relu(h, w1_ref, b1_ref)                 # block conv1 + ReLU
    v = conv_relu(u, w2_ref, b2_ref, residual=h)     # block conv2 + skip + ReLU

    # Global average pool (pooling matrix folds the 1/S scale) + branch FC.
    pooled = jnp.dot(pool_ref[...], v, preferred_element_type=jnp.float32)
    o_ref[0] = (jnp.dot(pooled, wf_ref[0], preferred_element_type=jnp.float32)
                + bf_ref[0][0:1, :])


def run_branch_pair(x_flat, pk, *, batch, spatial):
    """Run two ResNet branches sharing one channels-last flattened input."""
    spatial = tuple(int(s) for s in spatial)
    for s in spatial:
        if s & (s - 1):
            # TODO(synk): non power-of-two spatial dims need div/mod coords.
            raise ValueError("spatial dims must be powers of two")
    S = int(np.prod(spatial))
    M = batch * S
    Mp = _round_up(M, SUBLANE)
    C = x_flat.shape[-1]
    assert C <= LANE
    x_p = jnp.pad(x_flat.astype(jnp.float32), ((0, Mp - M), (0, LANE - C)))

    out_rows = _round_up(batch, SUBLANE)
    pool = np.zeros((out_rows, Mp), np.float32)
    for b in range(batch):
        pool[b, b * S:(b + 1) * S] = 1.0 / S

    deltas = tuple(itertools.product((-1, 0, 1), repeat=len(spatial)))
    T = len(deltas)
    assert pk["w_stem"].shape[1] == T

    kernel = functools.partial(_branch_pair_kernel, spatial=spatial,
                               deltas=deltas, roll_like_jnp=_roll_like_jnp())

    w_spec = pl.BlockSpec((1, T, LANE, LANE), lambda i: (i, 0, 0, 0))
    b_spec = pl.BlockSpec((1, SUBLANE, LANE), lambda i: (i, 0, 0))

    return pl.pallas_call(
        kernel,
        out_shape=jax.ShapeDtypeStruct((2, out_rows, LANE), jnp.float32),
        grid=(2,),
        in_specs=[
            pl.BlockSpec((Mp, LANE), lambda i: (0, 0)),        # shared input
            pl.BlockSpec((out_rows, Mp), lambda i: (0, 0)),    # pooling matrix
            w_spec, b_spec,                                    # stem
            w_spec, b_spec,                                    # conv1
            w_spec, b_spec,                                    # conv2
            pl.BlockSpec((1, LANE, LANE), lambda i: (i, 0, 0)),  # fc weight
            b_spec,                                            # fc bias
        ],
        out_specs=pl.BlockSpec((1, out_rows, LANE), lambda i: (i, 0, 0)),
        compiler_params=pltpu.CompilerParams(
            dimension_semantics=("parallel",),
            vmem_limit_bytes=40 * 1024 * 1024,
        ),
    )(x_p, jnp.asarray(pool), pk["w_stem"], pk["b_stem"],
      pk["w_conv1"], pk["b_conv1"], pk["w_conv2"], pk["b_conv2"],
      pk["w_fc"], pk["b_fc"])


# ----------------------------------------------------------------------------
# Fusion head: z2 = Linear64->32([x2|y2]); z = Linear96->32([x1|y1|z2]); 32->2
# (concats expressed as split matmuls; consumes the padded branch outputs).
# ----------------------------------------------------------------------------
def _fusion_head_kernel(o3_ref, o1_ref, wsa_ref, wsb_ref, bs_ref,
                        w1a_ref, w1b_ref, w1c_ref, b1_ref, w2_ref, b2_ref,
                        o_ref):
    x1, x2 = o3_ref[0], o3_ref[1]
    y1, y2 = o1_ref[0], o1_ref[1]
    z2 = (jnp.dot(x2, wsa_ref[...], preferred_element_type=jnp.float32)
          + jnp.dot(y2, wsb_ref[...], preferred_element_type=jnp.float32)
          + bs_ref[...])
    z = (jnp.dot(x1, w1a_ref[...], preferred_element_type=jnp.float32)
         + jnp.dot(y1, w1b_ref[...], preferred_element_type=jnp.float32)
         + jnp.dot(z2, w1c_ref[...], preferred_element_type=jnp.float32)
         + b1_ref[...])
    o_ref[...] = (jnp.dot(z, w2_ref[...], preferred_element_type=jnp.float32)
                  + b2_ref[...])


def run_fusion_head(out3, out1, hp):
    rows = out3.shape[1]
    return pl.pallas_call(
        _fusion_head_kernel,
        out_shape=jax.ShapeDtypeStruct((rows, LANE), jnp.float32),
    )(out3, out1, hp["wsa"], hp["wsb"], hp["bs"],
      hp["w1a"], hp["w1b"], hp["w1c"], hp["b1"], hp["w2"], hp["b2"])


# ----------------------------------------------------------------------------
# Forward pass
# ----------------------------------------------------------------------------
def resnet_fusion_forward(packed, data, tdata):
    # PyTorch NCDHW -> (B, D, H, W, C) and NCL -> (B, L, C), then flattened.
    B = data.shape[0]

    x3 = jnp.moveaxis(data, 1, -1)
    spatial3 = x3.shape[1:-1]
    x3f = x3.reshape(B * int(np.prod(spatial3)), x3.shape[-1])
    out3 = run_branch_pair(x3f, packed["sm"], batch=B, spatial=spatial3)

    x1d = jnp.moveaxis(tdata, 1, -1)
    spatial1 = x1d.shape[1:-1]
    x1f = x1d.reshape(B * int(np.prod(spatial1)), x1d.shape[-1])
    out1 = run_branch_pair(x1f, packed["ts"], batch=B, spatial=spatial1)

    return run_fusion_head(out3, out1, packed["head"])[:B, :2]


# ----------------------------------------------------------------------------
# Parameter packing (done once, outside jit): per-tap, lane-padded weights.
# ----------------------------------------------------------------------------
def _pack_branch_pair(branches, dims):
    T = 3 ** dims
    hidden = int(branches[0]["stem"][0].shape[1])
    c_in = int(branches[0]["stem"][0].shape[0]) // T
    num_class = int(branches[0]["fc"][0].shape[1])
    assert max(hidden, c_in, num_class) <= LANE

    def taps(w, cin):
        w = np.asarray(w, np.float32).reshape(T, cin, hidden)
        out = np.zeros((T, LANE, LANE), np.float32)
        out[:, :cin, :hidden] = w
        return out

    def bias(b):
        b = np.asarray(b, np.float32)
        out = np.zeros((SUBLANE, LANE), np.float32)
        out[0, :b.shape[0]] = b
        return out

    def fc(w):
        w = np.asarray(w, np.float32)
        out = np.zeros((LANE, LANE), np.float32)
        out[:hidden, :num_class] = w
        return out

    packed = {
        "w_stem": np.stack([taps(p["stem"][0], c_in) for p in branches]),
        "b_stem": np.stack([bias(p["stem"][1]) for p in branches]),
        "w_conv1": np.stack([taps(p["conv1"][0], hidden) for p in branches]),
        "b_conv1": np.stack([bias(p["conv1"][1]) for p in branches]),
        "w_conv2": np.stack([taps(p["conv2"][0], hidden) for p in branches]),
        "b_conv2": np.stack([bias(p["conv2"][1]) for p in branches]),
        "w_fc": np.stack([fc(p["fc"][0]) for p in branches]),
        "b_fc": np.stack([bias(p["fc"][1]) for p in branches]),
    }
    return {k: jnp.asarray(v) for k, v in packed.items()}


def _pack_head(head):
    def pad_w(w):
        w = np.asarray(w, np.float32)
        out = np.zeros((LANE, LANE), np.float32)
        out[:w.shape[0], :w.shape[1]] = w
        return out

    def pad_b(b):
        b = np.asarray(b, np.float32)
        out = np.zeros((1, LANE), np.float32)
        out[0, :b.shape[0]] = b
        return out

    w_smts = np.asarray(head["w_smts"], np.float32)
    w1 = np.asarray(head["w1"], np.float32)
    packed = {
        "wsa": pad_w(w_smts[:32]), "wsb": pad_w(w_smts[32:64]),
        "bs": pad_b(head["b_smts"]),
        "w1a": pad_w(w1[:32]), "w1b": pad_w(w1[32:64]), "w1c": pad_w(w1[64:96]),
        "b1": pad_b(head["b1"]),
        "w2": pad_w(head["w2"]), "b2": pad_b(head["b2"]),
    }
    return {k: jnp.asarray(v) for k, v in packed.items()}


def prepare_params(params):
    _roll_like_jnp()   # resolve roll direction once, eagerly
    return {
        "sm": _pack_branch_pair([params["sm1"], params["sm2"]], dims=3),
        "ts": _pack_branch_pair([params["ts1"], params["ts2"]], dims=1),
        "head": _pack_head(params["head"]),
    }


# ----------------------------------------------------------------------------
# Deterministic parameter init (unchanged)
# ----------------------------------------------------------------------------
def init_linear(key, fan_in, fan_out):
    k1, k2 = jax.random.split(key)
    bound = 1.0 / np.sqrt(fan_in)
    w = jax.random.uniform(k1, (fan_in, fan_out), jnp.float32, -bound, bound)
    b = jax.random.uniform(k2, (fan_out,), jnp.float32, -bound, bound)
    return w, b


def init_resnet(key, dims, c_in, hidden, num_class, ksize=3):
    keys = jax.random.split(key, 4)
    kd = ksize ** dims
    return {
        "stem": init_linear(keys[0], kd * c_in, hidden),
        "conv1": init_linear(keys[1], kd * hidden, hidden),
        "conv2": init_linear(keys[2], kd * hidden, hidden),
        "fc": init_linear(keys[3], hidden, num_class),
    }


# ----------------------------------------------------------------------------
# Pure-JAX reference (same math, no Pallas) for correctness
# ----------------------------------------------------------------------------
def im2col(x, dims, k=3, pad=1):
    if dims == 3:
        B, D, H, W, C = x.shape
        xp = jnp.pad(x, ((0, 0), (pad, pad), (pad, pad), (pad, pad), (0, 0)))
        cols = [xp[:, a:a + D, b:b + H, c:c + W, :]
                for a in range(k) for b in range(k) for c in range(k)]
    else:
        B, L, C = x.shape
        xp = jnp.pad(x, ((0, 0), (pad, pad), (0, 0)))
        cols = [xp[:, a:a + L, :] for a in range(k)]
    return jnp.concatenate(cols, axis=-1)


def ref_resnet_forward(p, x, dims):
    B = x.shape[0]
    spatial = x.shape[1:-1]
    S = int(np.prod(spatial))
    patches = im2col(x, dims).reshape(B * S, -1)
    h = jnp.maximum(patches @ p["stem"][0] + p["stem"][1], 0.0)
    hid = h.shape[-1]
    p1 = im2col(h.reshape((B,) + spatial + (hid,)), dims).reshape(B * S, -1)
    u = jnp.maximum(p1 @ p["conv1"][0] + p["conv1"][1], 0.0)
    p2 = im2col(u.reshape((B,) + spatial + (hid,)), dims).reshape(B * S, -1)
    v = jnp.maximum(p2 @ p["conv2"][0] + p["conv2"][1] + h, 0.0)
    pooled = jnp.mean(v.reshape(B, S, hid), axis=1)
    return pooled @ p["fc"][0] + p["fc"][1]


def ref_forward(params, data, tdata):
    x3 = jnp.moveaxis(data, 1, -1)
    x1d = jnp.moveaxis(tdata, 1, -1)
    x1 = ref_resnet_forward(params["sm1"], x3, 3)
    y1 = ref_resnet_forward(params["ts1"], x1d, 1)
    x2 = ref_resnet_forward(params["sm2"], x3, 3)
    y2 = ref_resnet_forward(params["ts2"], x1d, 1)
    head = params["head"]
    z2 = jnp.concatenate([x2, y2], axis=1) @ head["w_smts"] + head["b_smts"]
    z = jnp.concatenate([x1, y1, z2], axis=1) @ head["w1"] + head["b1"]
    return z @ head["w2"] + head["b2"]


# ----------------------------------------------------------------------------
if __name__ == "__main__":
    key = jax.random.PRNGKey(0)
    ks = jax.random.split(key, 9)

    B, C_IN, D3, L1 = 2, 4, 8, 16       # batch, channels, 3D spatial, 1D length
    HIDDEN, NUM_CLASS = 8, 32

    w_smts, b_smts = init_linear(ks[4], 64, 32)
    w1, b1 = init_linear(ks[5], 96, 32)
    w2, b2 = init_linear(ks[6], 32, 2)

    params = {
        "sm1": init_resnet(ks[0], 3, C_IN, HIDDEN, NUM_CLASS),
        "ts1": init_resnet(ks[1], 1, C_IN, HIDDEN, NUM_CLASS),
        "sm2": init_resnet(ks[2], 3, C_IN, HIDDEN, NUM_CLASS),
        "ts2": init_resnet(ks[3], 1, C_IN, HIDDEN, NUM_CLASS),
        "head": {"w_smts": w_smts, "b_smts": b_smts,
                 "w1": w1, "b1": b1, "w2": w2, "b2": b2},
    }
    packed = prepare_params(params)

    # PyTorch-convention inputs: data is NCDHW, tdata is NCL.
    data = jax.random.normal(ks[7], (B, C_IN, D3, D3, D3), jnp.float32)
    tdata = jax.random.normal(ks[8], (B, C_IN, L1), jnp.float32)

    fwd = jax.jit(resnet_fusion_forward)
    out = jax.block_until_ready(fwd(packed, data, tdata))
    assert out.shape == (B, 2)

    ref = ref_forward(params, data, tdata)
    np.testing.assert_allclose(np.asarray(out), np.asarray(ref),
                               rtol=1e-4, atol=1e-4)
    print("KERNEL_OK")
</pallas_src>

<mosaic_0001>
module attributes {stable_mosaic.version = 11 : i64} {
  func.func @probe(%arg0: memref<8x128xf32, #tpu.memory_space<vmem>>, %arg1: memref<8x128xf32, #tpu.memory_space<vmem>>) attributes {dimension_semantics = [], scalar_prefetch = 0 : i64, scratch_operands = 0 : i64, tpu.core_type = #tpu.core_type<tc>} {
    %c0 = arith.constant 0 : index
    %c0_0 = arith.constant 0 : index
    %0 = vector.load %arg0[%c0, %c0_0] : memref<8x128xf32, #tpu.memory_space<vmem>>, vector<8x128xf32>
    %c1_i32 = arith.constant 1 : i32
    %1 = tpu.dynamic_rotate %0 by %c1_i32 dim 0 : vector<8x128xf32>, i32 -> vector<8x128xf32>
    %c0_1 = arith.constant 0 : index
    %c0_2 = arith.constant 0 : index
    %2 = vector.load %arg1[%c0_1, %c0_2] : memref<8x128xf32, #tpu.memory_space<vmem>>, vector<8x128xf32>
    tpu.vector_store %arg1[%c0_1, %c0_2], %1 {strides = array<i32>} : memref<8x128xf32, #tpu.memory_space<vmem>>, vector<8x128xf32>,
    return
  }
}

</mosaic_0001>

<llo_original>
// kernel: tpu_custom_call.1
$region0: #{tpu_custom_call.1}
  #allocation0 [shape = 'u32[]', space=smem, size = 0x4, offset = 0x4, fixed_abs, tag = 'smem constant byte address 0x4 - core index']
  #allocation1 [shape = 'u32[72,128]{1,0:T(1,128)}', space=vmem, size = 0x9000, scoped, tag = 'internal scratch']
  %s0 = inlined_call_operand.hbm [shape: f32[8,128], index: 0, kind: input, shape index: {}]
  %s1 = inlined_call_operand.hbm [shape: f32[8,128], index: 1, kind: output, shape index: {}]
  %s2 = sld [smem:[#allocation0]]
  $region18: #{tpu_custom_call.1} parent=0
    _
  %s4 = ssub.s32 1, %s2
  %s5 = scalar_select 0, %s4, %s2
  $region1: #{tpu_custom_call.1} parent=0
    #allocation2 [shape = 'u8[4096]{0}', space=vmem, size = 0x1000, scoped, tag = 'input window, operand 0, single buffered']
    #allocation3 [shape = 's32[1]{0}', space=sflag, size = 0x4, scoped, tag = 'scoped memory for tpu_custom_call.1']
    #allocation4 [shape = 's32[1]{0}', space=sflag, size = 0x4, scoped, tag = 'scoped memory for tpu_custom_call.1']
    #allocation5 [shape = 'u8[4096]{0}', space=vmem, size = 0x1000, scoped, tag = 'output window, operand 0, single buffered']
    %6 = vsyncpa [#allocation3], 0
    %7 = vsyncpa [#allocation4], 0
    // Predicated region
    $region2: #{tpu_custom_call.1} parent=1 // pred_check
      _
    $region3: #{tpu_custom_call.1} parent=1 // pred_check_branch
      %9 = sbr.rel (0) target = $region5
    $region4: #{tpu_custom_call.1} parent=1 // pred_region
      %11 = vsyncadd [#allocation3], 0
      %s13 = sshll.u32 %s0, 4
      %s14 = int_to_ptr.hbm [resolvable:$true] %s13
      %s15 = sshll.u32 [#allocation2], 4
      %s16 = int_to_ptr.vmem [resolvable:$true] %s15
      %18 = dma.hbm_to_vmem [thread:$0]  %s14, 128, %s16, [#allocation3]
    $region5: #{tpu_custom_call.1} parent=1 // pred_fallthru
      _
    // Predicated region
    $region6: #{tpu_custom_call.1} parent=1 // pred_check
      _
    $region7: #{tpu_custom_call.1} parent=1 // pred_check_branch
      %20 = sbr.rel (0) target = $region9
    $region8: #{tpu_custom_call.1} parent=1 // pred_region
      %22 = dma.done [#allocation3], 128
    $region9: #{tpu_custom_call.1} parent=1 // pred_fallthru
      _
    %v23 = vld [vmem:[#allocation2] sm:$0xff]
    %v24 = vrot.slane %v23, 7
    %25 = vst [vmem:[#allocation5] sm:$0xff] %v24
    // Predicated region
    $region10: #{tpu_custom_call.1} parent=1 // pred_check
      _
    $region11: #{tpu_custom_call.1} parent=1 // pred_check_branch
      %27 = sbr.rel (0) target = $region13
    $region12: #{tpu_custom_call.1} parent=1 // pred_region
      %29 = vsyncadd [#allocation4], 0
      %s31 = sshll.u32 [#allocation5], 4
      %s32 = int_to_ptr.vmem [resolvable:$true] %s31
      %s33 = sshll.u32 %s1, 4
      %s34 = int_to_ptr.hbm [resolvable:$true] %s33
      %36 = dma.vmem_to_hbm [thread:$0]  %s32, 128, %s34, [#allocation4]
    $region13: #{tpu_custom_call.1} parent=1 // pred_fallthru
      _
    // Predicated region
    $region14: #{tpu_custom_call.1} parent=1 // pred_check
      _
    $region15: #{tpu_custom_call.1} parent=1 // pred_check_branch
      %38 = sbr.rel (0) target = $region17
    $region16: #{tpu_custom_call.1} parent=1 // pred_region
      %40 = dma.done [#allocation4], 128
    $region17: #{tpu_custom_call.1} parent=1 // pred_fallthru
      _
    %41 = vsyncpa [#allocation3], 1
    %42 = vsyncpa [#allocation4], 1

</llo_original>
